<compile_context>
chip_gen: v5e
topology: v5e:2x2
jax: 0.10.0
libtpu: 0.0.40
codegen_flags: <defaults>
</compile_context>

<pallas_src>
import math
import functools

import jax
import jax.numpy as jnp
from jax.experimental import pallas as pl
from jax.experimental.pallas import tpu as pltpu


# ----------------------------------------------------------------------------
# PE table (constant buffer; built once in plain JAX, mirrors __init__).
# ----------------------------------------------------------------------------
def make_pe(d_model: int, max_len: int, dtype=jnp.float32) -> jnp.ndarray:
    position = jnp.arange(max_len, dtype=jnp.float32)[:, None]          # (max_len, 1)
    div_term = jnp.exp(
        jnp.arange(0, d_model, 2, dtype=jnp.float32)
        * (-math.log(10000.0) / d_model)
    )                                                                   # (d_model/2,)
    angles = position * div_term                                        # (max_len, d_model/2)
    pe = jnp.zeros((max_len, d_model), dtype=jnp.float32)
    pe = pe.at[:, 0::2].set(jnp.sin(angles))
    pe = pe.at[:, 1::2].set(jnp.cos(angles))
    return pe.astype(dtype)                                             # (max_len, d_model)


# ----------------------------------------------------------------------------
# Kernels (operate on the flattened (B, L = S*D) view).
# ----------------------------------------------------------------------------
def _pe_add_kernel(x_ref, pe_ref, o_ref):
    # x_ref: (TB, TL), pe_ref: (1, TL) -- sublane-broadcast add over batch rows.
    o_ref[...] = (x_ref[...] + pe_ref[...]).astype(o_ref.dtype)


def _pe_add_dropout_kernel(x_ref, pe_ref, bits_ref, o_ref, *, threshold, scale):
    # Inverted dropout: keep w.p. (1-p), scale kept values by 1/(1-p).
    # bits are i.i.d. uniform int32; integer threshold compare replaces the
    # shift/convert/mul/float-compare chain, and the scale is folded into the
    # select (no zeros_like materialized).
    y = x_ref[...] + pe_ref[...]
    keep = bits_ref[...] < jnp.int32(threshold)
    o_ref[...] = (y * jnp.where(keep, jnp.float32(scale),
                                jnp.float32(0.0))).astype(o_ref.dtype)


# ----------------------------------------------------------------------------
# Tiling heuristic: large lane-dense slabs within a VMEM budget.
# ----------------------------------------------------------------------------
def _pick_tiles(B, L, itemsize, n_bufs=8, budget_bytes=24 * 1024 * 1024):
    """Pick (tb, tl) for the flattened (B, L) view.

    n_bufs ~ double-buffered x, out, bits plus PE.  Budget keeps the kernel
    comfortably inside v7x's 64 MiB VMEM (and its 32 MiB default scoped limit).
    """
    max_elems = max(budget_bytes // (n_bufs * itemsize), 8 * 128)

    # Lane tile: largest multiple-of-128 divisor of L that keeps an 8-row
    # block inside the budget (lane-dense -> unmasked vst).
    if L % 128 == 0:
        tl = 128
        cand = 128
        limit = min(L, max_elems // 8)
        while cand <= limit:
            if L % cand == 0:
                tl = cand
            cand += 128
    else:
        # TODO(synk): L not a multiple of 128 -> single lane tile (correct, but
        # lane-masked stores when L < 128).
        tl = L

    # Batch tile: full B if it fits (or B has no multiple-of-8 divisor);
    # otherwise the largest multiple-of-8 divisor of B that fits the budget.
    if B * tl <= max_elems or B % 8 != 0:
        tb = B
    else:
        tb = 8
        cand = 8
        limit = min(B, max(max_elems // tl, 8))
        while cand <= limit:
            if B % cand == 0:
                tb = cand
            cand += 8
    return tb, tl


# ----------------------------------------------------------------------------
# Wrapper: forward of PositionalEncoding == dropout(x + pe[:, :S])
# ----------------------------------------------------------------------------
def positional_encoding(x, pe, *, dropout_p: float = 0.1, train: bool = False,
                        rng_key=None, donate_x: bool = False):
    """x: (B, S, D); pe: (max_len, D) from make_pe(); returns (B, S, D)."""
    B, S, D = x.shape
    L = S * D

    # Lane-dense 2-D views (free reshapes: contiguous trailing-dim collapse).
    x2 = x.reshape(B, L)
    pe2 = pe[:S, :].astype(x.dtype).reshape(1, L)   # self.pe[:, :x.size(1)]

    tb, tl = _pick_tiles(B, L, jnp.dtype(x.dtype).itemsize)
    # Lane tiles outer, batch tiles inner: PE block index is constant while the
    # batch axis cycles, so its DMA is not re-issued every step.
    grid = (L // tl, B // tb)

    x_spec = pl.BlockSpec((tb, tl), lambda j, i: (i, j))
    pe_spec = pl.BlockSpec((1, tl), lambda j, i: (0, j))
    out_spec = pl.BlockSpec((tb, tl), lambda j, i: (i, j))
    out_shape = jax.ShapeDtypeStruct((B, L), x.dtype)

    cparams = pltpu.CompilerParams(
        dimension_semantics=("parallel", "parallel"),
        vmem_limit_bytes=32 * 1024 * 1024,
    )
    aliases = {0: 0} if donate_x else {}   # x and out share shape/dtype

    if (not train) or dropout_p == 0.0:
        # NOTE: in eval mode this is a single fusable elementwise add; in a
        # full model it can be cheaper to let XLA fuse `x + pe` into its
        # producer/consumer than to pay an extra HBM round-trip through a
        # custom call.  Kept here to exercise the Pallas path.
        out2 = pl.pallas_call(
            _pe_add_kernel,
            out_shape=out_shape,
            grid_spec=pltpu.PrefetchScalarGridSpec(
                num_scalar_prefetch=0,
                grid=grid,
                in_specs=[x_spec, pe_spec],
                out_specs=out_spec,
            ),
            compiler_params=cparams,
            input_output_aliases=aliases,
        )(x2, pe2)
        return out2.reshape(B, S, D)

    # ---------------- training path: inverted dropout -----------------------
    if rng_key is None:
        rng_key = jax.random.PRNGKey(0)
    bits = jax.lax.bitcast_convert_type(
        jax.random.bits(rng_key, (B, L), dtype=jnp.uint32), jnp.int32)

    p = float(dropout_p)
    # P(int32_uniform < threshold) == 1 - p
    threshold = int(round((1.0 - p) * 2.0 ** 32)) - 2 ** 31
    threshold = max(min(threshold, 2 ** 31 - 1), -(2 ** 31))
    kernel = functools.partial(_pe_add_dropout_kernel,
                               threshold=threshold, scale=1.0 / (1.0 - p))

    out2 = pl.pallas_call(
        kernel,
        out_shape=out_shape,
        grid_spec=pltpu.PrefetchScalarGridSpec(
            num_scalar_prefetch=0,
            grid=grid,
            in_specs=[x_spec, pe_spec, x_spec],   # bits tiled exactly like x
            out_specs=out_spec,
        ),
        compiler_params=cparams,
        input_output_aliases=aliases,
    )(x2, pe2, bits)
    return out2.reshape(B, S, D)


# ----------------------------------------------------------------------------
# Main
# ----------------------------------------------------------------------------
if __name__ == "__main__":
    d_model = 32
    max_len = 16
    dropout_p = 0.1
    batch, seq = 2, 8

    root = jax.random.PRNGKey(0)
    kx, kdrop = jax.random.split(root)
    x = jax.random.normal(kx, (batch, seq, d_model), dtype=jnp.float32)
    pe = make_pe(d_model, max_len)

    # Eval-mode forward (dropout = identity).
    out = positional_encoding(x, pe, dropout_p=dropout_p, train=False)
    out = jax.block_until_ready(out)

    ref = x + pe[None, :seq, :]
    assert out.shape == (batch, seq, d_model)
    assert jnp.allclose(out, ref, atol=1e-6), "eval-mode mismatch vs reference"

    # Training-mode forward (inverted dropout): every output element must be
    # either 0 (dropped) or (x + pe) / (1 - p) (kept & rescaled).
    out_tr = positional_encoding(x, pe, dropout_p=dropout_p, train=True,
                                 rng_key=kdrop)
    out_tr = jax.block_until_ready(out_tr)
    scaled = ref / (1.0 - dropout_p)
    valid = jnp.isclose(out_tr, 0.0, atol=1e-6) | jnp.isclose(
        out_tr, scaled, rtol=1e-5, atol=1e-6)
    assert bool(jnp.all(valid)), "training-mode dropout values out of range"

    print("KERNEL_OK")
</pallas_src>

<mosaic_0001>
module attributes {stable_mosaic.version = 11 : i64} {
  func.func @_pe_add_kernel(%arg0: i32, %arg1: i32, %arg2: memref<2x256xf32, #tpu.memory_space<vmem>>, %arg3: memref<1x256xf32, #tpu.memory_space<vmem>>, %arg4: memref<2x256xf32, #tpu.memory_space<vmem>>) attributes {dimension_semantics = [#tpu.dimension_semantics<parallel>, #tpu.dimension_semantics<parallel>], iteration_bounds = array<i64: 1, 1>, scalar_prefetch = 0 : i64, scratch_operands = 0 : i64, tpu.core_type = #tpu.core_type<tc>, window_params = [{transform_indices = @transform_0, window_bounds = array<i64: 2, 256>}, {transform_indices = @transform_1, window_bounds = array<i64: 1, 256>}, {transform_indices = @transform_2, window_bounds = array<i64: 2, 256>}]} {
    %c0 = arith.constant 0 : index
    %c0_0 = arith.constant 0 : index
    %0 = vector.load %arg2[%c0, %c0_0] : memref<2x256xf32, #tpu.memory_space<vmem>>, vector<2x256xf32>
    %c0_1 = arith.constant 0 : index
    %c0_2 = arith.constant 0 : index
    %1 = vector.load %arg3[%c0_1, %c0_2] : memref<1x256xf32, #tpu.memory_space<vmem>>, vector<1x256xf32>
    %2 = vector.broadcast %1 : vector<1x256xf32> to vector<2x256xf32>
    %3 = arith.addf %0, %2 : vector<2x256xf32>
    %c0_3 = arith.constant 0 : index
    %c0_4 = arith.constant 0 : index
    %4 = vector.load %arg4[%c0_3, %c0_4] : memref<2x256xf32, #tpu.memory_space<vmem>>, vector<2x256xf32>
    tpu.vector_store %arg4[%c0_3, %c0_4], %3 {strides = array<i32>} : memref<2x256xf32, #tpu.memory_space<vmem>>, vector<2x256xf32>,
    return
  }
  func.func @transform_0(%arg0: i32, %arg1: i32) -> (i32, i32) {
    %c0_i32 = arith.constant 0 : i32
    return %arg1, %arg0 : i32, i32
  }
  func.func @transform_1(%arg0: i32, %arg1: i32) -> (i32, i32) {
    %c0_i32 = arith.constant 0 : i32
    %c0_i32_0 = arith.constant 0 : i32
    return %c0_i32, %arg0 : i32, i32
  }
  func.func @transform_2(%arg0: i32, %arg1: i32) -> (i32, i32) {
    %c0_i32 = arith.constant 0 : i32
    return %arg1, %arg0 : i32, i32
  }
}

</mosaic_0001>

<llo_original>
// kernel: tpu_custom_call.1
$region0: #{tpu_custom_call.1}
  #allocation0 [shape = 'u32[]', space=smem, size = 0x4, offset = 0x4, fixed_abs, tag = 'smem constant byte address 0x4 - core index']
  #allocation1 [shape = 'u32[72,128]{1,0:T(1,128)}', space=vmem, size = 0x9000, scoped, tag = 'internal scratch']
  %s0 = inlined_call_operand.hbm [shape: f32[2,256], index: 0, kind: input, shape index: {}]
  %s1 = inlined_call_operand.hbm [shape: f32[1,256], index: 1, kind: input, shape index: {}]
  %s2 = inlined_call_operand.hbm [shape: f32[2,256], index: 2, kind: output, shape index: {}]
  %s3 = sld [smem:[#allocation0]]
  $region26: #{tpu_custom_call.1} parent=0
    _
  %s5 = ssub.s32 1, %s3
  %s6 = scalar_select 0, %s5, %s3
  $region1: #{tpu_custom_call.1} parent=0
    #allocation2 [shape = 'u8[2048]{0}', space=vmem, size = 0x800, scoped, tag = 'input window, operand 0, single buffered']
    #allocation3 [shape = 's32[1]{0}', space=sflag, size = 0x4, scoped, tag = 'scoped memory for tpu_custom_call.1']
    #allocation4 [shape = 's32[1]{0}', space=sflag, size = 0x4, scoped, tag = 'scoped memory for tpu_custom_call.1']
    #allocation5 [shape = 'u8[1024]{0}', space=vmem, size = 0x400, scoped, tag = 'input window, operand 1, single buffered']
    #allocation6 [shape = 's32[1]{0}', space=sflag, size = 0x4, scoped, tag = 'scoped memory for tpu_custom_call.1']
    #allocation7 [shape = 'u8[2048]{0}', space=vmem, size = 0x800, scoped, tag = 'output window, operand 0, single buffered']
    %7 = vsyncpa [#allocation3], 0
    %8 = vsyncpa [#allocation6], 0
    %9 = vsyncpa [#allocation4], 0
    // Predicated region
    $region2: #{tpu_custom_call.1} parent=1 // pred_check
      _
    $region3: #{tpu_custom_call.1} parent=1 // pred_check_branch
      %11 = sbr.rel (0) target = $region5
    $region4: #{tpu_custom_call.1} parent=1 // pred_region
      %13 = vsyncadd [#allocation3], 0
      %s15 = sshll.u32 %s0, 4
      %s16 = int_to_ptr.hbm [resolvable:$true] %s15
      %s17 = sshll.u32 [#allocation2], 4
      %s18 = int_to_ptr.vmem [resolvable:$true] %s17
      %20 = dma.hbm_to_vmem [thread:$0]  %s16, 64, %s18, [#allocation3]
    $region5: #{tpu_custom_call.1} parent=1 // pred_fallthru
      _
    // Predicated region
    $region6: #{tpu_custom_call.1} parent=1 // pred_check
      _
    $region7: #{tpu_custom_call.1} parent=1 // pred_check_branch
      %22 = sbr.rel (0) target = $region9
    $region8: #{tpu_custom_call.1} parent=1 // pred_region
      %24 = vsyncadd [#allocation6], 0
      %s26 = sshll.u32 %s1, 4
      %s27 = int_to_ptr.hbm [resolvable:$true] %s26
      %s28 = sshll.u32 [#allocation5], 4
      %s29 = int_to_ptr.vmem [resolvable:$true] %s28
      %31 = dma.hbm_to_vmem [thread:$0]  %s27, 32, %s29, [#allocation6]
    $region9: #{tpu_custom_call.1} parent=1 // pred_fallthru
      _
    // Predicated region
    $region10: #{tpu_custom_call.1} parent=1 // pred_check
      _
    $region11: #{tpu_custom_call.1} parent=1 // pred_check_branch
      %33 = sbr.rel (0) target = $region13
    $region12: #{tpu_custom_call.1} parent=1 // pred_region
      %35 = dma.done [#allocation3], 64
    $region13: #{tpu_custom_call.1} parent=1 // pred_fallthru
      _
    // Predicated region
    $region14: #{tpu_custom_call.1} parent=1 // pred_check
      _
    $region15: #{tpu_custom_call.1} parent=1 // pred_check_branch
      %37 = sbr.rel (0) target = $region17
    $region16: #{tpu_custom_call.1} parent=1 // pred_region
      %39 = dma.done [#allocation6], 32
    $region17: #{tpu_custom_call.1} parent=1 // pred_fallthru
      _
    %v40 = vld [vmem:[#allocation2] sm:$0xf]
    %v41 = vld [vmem:[#allocation5] sm:$0x3]
    %v43 = vperm.slane %v41, 0
    %v44 = vperm.slane %v41, 1
    %v45 = vrot.slane %v44, 6
    %vm46 = vcmask 1041408
    %v47 = vsel %vm46, %v43, %v45
    %v49 = vadd.f32 %v40, %v47
    %50 = vst [vmem:[#allocation7] sm:$0xf] %v49
    // Predicated region
    $region18: #{tpu_custom_call.1} parent=1 // pred_check
      _
    $region19: #{tpu_custom_call.1} parent=1 // pred_check_branch
      %52 = sbr.rel (0) target = $region21
    $region20: #{tpu_custom_call.1} parent=1 // pred_region
      %54 = vsyncadd [#allocation4], 0
      %s56 = sshll.u32 [#allocation7], 4
      %s57 = int_to_ptr.vmem [resolvable:$true] %s56
      %s58 = sshll.u32 %s2, 4
      %s59 = int_to_ptr.hbm [resolvable:$true] %s58
      %61 = dma.vmem_to_hbm [thread:$0]  %s57, 64, %s59, [#allocation4]
    $region21: #{tpu_custom_call.1} parent=1 // pred_fallthru
      _
    // Predicated region
    $region22: #{tpu_custom_call.1} parent=1 // pred_check
      _
    $region23: #{tpu_custom_call.1} parent=1 // pred_check_branch
      %63 = sbr.rel (0) target = $region25
    $region24: #{tpu_custom_call.1} parent=1 // pred_region
      %65 = dma.done [#allocation4], 64
    $region25: #{tpu_custom_call.1} parent=1 // pred_fallthru
      _
    %66 = vsyncpa [#allocation3], 1
    %67 = vsyncpa [#allocation6], 1
    %68 = vsyncpa [#allocation4], 1

</llo_original>
